<compile_context>
chip_gen: v7x
topology: tpu7x:2x2x1
jax: 0.10.0
libtpu: 0.0.40
codegen_flags: <defaults>
</compile_context>

<pallas_src>
import functools

import jax
import jax.numpy as jnp
from jax.experimental import pallas as pl
from jax.experimental.pallas import tpu as pltpu


TILE_N = 512  # lane-dim tile for the conv matmuls (multiple of 128)


def _round_up(x, m):
    return (x + m - 1) // m * m


# ----------------------------------------------------------------------------
# Pallas kernels
# ----------------------------------------------------------------------------
def _matmul_t_kernel(w_ref, x_ref, b_ref, o_ref, *, apply_relu):
    # w: (Cout_p, K_p), x: (K_p, TN), b: (Cout_p, 1) -> o: (Cout_p, TN)
    acc = jnp.dot(w_ref[...], x_ref[...], preferred_element_type=jnp.float32)
    acc = acc + b_ref[...]
    if apply_relu:
        acc = jnp.maximum(acc, 0.0)
    o_ref[...] = acc.astype(o_ref.dtype)


def matmul_t_bias_act(wm, bias, patches, *, apply_relu):
    """out = act(wm @ patches + bias[:, None]) with lane-dense (Cout, N) output.

    wm: (Cout, K), bias: (Cout,), patches: (K, N).  Returns (Cout, N) f32.
    """
    Cout, K = wm.shape
    _, N = patches.shape
    Cp = _round_up(Cout, 8)
    Kp = _round_up(K, 8)
    tn = TILE_N if N > TILE_N else _round_up(N, 128)
    Np = _round_up(N, tn)

    wp = jnp.pad(wm.astype(jnp.float32), ((0, Cp - Cout), (0, Kp - K)))
    bp = jnp.pad(bias.astype(jnp.float32), (0, Cp - Cout)).reshape(Cp, 1)
    pp = jnp.pad(patches.astype(jnp.float32), ((0, Kp - K), (0, Np - N)))

    kernel = functools.partial(_matmul_t_kernel, apply_relu=apply_relu)
    out = pl.pallas_call(
        kernel,
        out_shape=jax.ShapeDtypeStruct((Cp, Np), jnp.float32),
        grid=(Np // tn,),
        in_specs=[
            pl.BlockSpec((Cp, Kp), lambda n: (0, 0)),
            pl.BlockSpec((Kp, tn), lambda n: (0, n)),
            pl.BlockSpec((Cp, 1), lambda n: (0, 0)),
        ],
        out_specs=pl.BlockSpec((Cp, tn), lambda n: (0, n)),
        compiler_params=pltpu.CompilerParams(
            dimension_semantics=("parallel",)),
    )(wp, pp, bp)
    return out[:Cout, :N]


def _fc_stack_kernel(x_ref, w5_ref, b5_ref, w6_ref, b6_ref, w7_ref, b7_ref,
                     o_ref):
    # Fused Linear(400->120)+ReLU, Linear(120->84)+ReLU, Linear(84->10),
    # all hidden dims zero-padded to 128 so every dot/store is lane-dense.
    h = jnp.dot(x_ref[...], w5_ref[...], preferred_element_type=jnp.float32)
    h = jnp.maximum(h + b5_ref[...], 0.0)
    h = jnp.dot(h, w6_ref[...], preferred_element_type=jnp.float32)
    h = jnp.maximum(h + b6_ref[...], 0.0)
    h = jnp.dot(h, w7_ref[...], preferred_element_type=jnp.float32)
    o_ref[...] = (h + b7_ref[...]).astype(o_ref.dtype)


def fc_stack(x, p):
    """x: (B, 400) -> logits (B, 10), single fused pallas_call."""
    B, F = x.shape
    H1 = H2 = H3 = 128  # padded 120 / 84 / 10

    w5 = jnp.pad(p["w5"].T, ((0, 0), (0, H1 - 120)))          # (400, 128)
    b5 = jnp.pad(p["b5"], (0, H1 - 120)).reshape(1, H1)
    w6 = jnp.pad(p["w6"].T, ((0, H1 - 120), (0, H2 - 84)))     # (128, 128)
    b6 = jnp.pad(p["b6"], (0, H2 - 84)).reshape(1, H2)
    w7 = jnp.pad(p["w7"].T, ((0, H2 - 84), (0, H3 - 10)))      # (128, 128)
    b7 = jnp.pad(p["b7"], (0, H3 - 10)).reshape(1, H3)

    TB = 128 if B >= 128 else _round_up(B, 8)
    Bp = _round_up(B, TB)
    xp = jnp.pad(x, ((0, Bp - B), (0, 0)))

    out = pl.pallas_call(
        _fc_stack_kernel,
        out_shape=jax.ShapeDtypeStruct((Bp, H3), jnp.float32),
        grid=(Bp // TB,),
        in_specs=[
            pl.BlockSpec((TB, F), lambda i: (i, 0)),
            pl.BlockSpec((F, H1), lambda i: (0, 0)),
            pl.BlockSpec((1, H1), lambda i: (0, 0)),
            pl.BlockSpec((H1, H2), lambda i: (0, 0)),
            pl.BlockSpec((1, H2), lambda i: (0, 0)),
            pl.BlockSpec((H2, H3), lambda i: (0, 0)),
            pl.BlockSpec((1, H3), lambda i: (0, 0)),
        ],
        out_specs=pl.BlockSpec((TB, H3), lambda i: (i, 0)),
        compiler_params=pltpu.CompilerParams(
            dimension_semantics=("parallel",)),
    )(xp, w5, b5, w6, b6, w7, b7)
    return out[:B, :10]


# ----------------------------------------------------------------------------
# Thin XLA glue: transposed im2col and 2x2 max-pool (per perf review).
# ----------------------------------------------------------------------------
def _pool2x2_cnhw(x):
    # x: (C, B, H, W) -> (C, B, H//2, W//2); plain jnp per review guidance.
    C, B, H, W = x.shape
    return x.reshape(C, B, H // 2, 2, W // 2, 2).max(axis=(3, 5))


# ----------------------------------------------------------------------------
# Full forward pass (LeNet on 28x28 single-channel input)
# ----------------------------------------------------------------------------
def forward(x, params):
    p = params
    B = x.shape[0]

    # conv1: Conv2d(1, 6, k=5, padding=2) + ReLU, output kept in (C,B,H,W).
    xs = x.reshape(B, 28, 28)
    xp = jnp.pad(xs, ((0, 0), (2, 2), (2, 2)))                       # (B,32,32)
    patches1 = jnp.stack(
        [xp[:, i:i + 28, j:j + 28] for i in range(5) for j in range(5)],
        axis=0).reshape(25, B * 28 * 28)                             # (25, B*784)
    w1m = p["w1"].reshape(6, 25)                                     # (kh,kw) order
    c1 = matmul_t_bias_act(w1m, p["b1"], patches1, apply_relu=True)  # (6, B*784)
    c1 = c1.reshape(6, B, 28, 28)

    # pool1
    p1 = _pool2x2_cnhw(c1)                                           # (6,B,14,14)

    # conv2: Conv2d(6, 16, k=5) + ReLU
    patches2 = jnp.stack(
        [p1[:, :, i:i + 10, j:j + 10] for i in range(5) for j in range(5)],
        axis=0).reshape(25 * 6, B * 10 * 10)                         # (150, B*100)
    # K ordering of patches2 is ((kh,kw) major, cin minor) -> permute weights.
    w2m = p["w3"].transpose(0, 2, 3, 1).reshape(16, 150)
    c2 = matmul_t_bias_act(w2m, p["b3"], patches2, apply_relu=True)  # (16, B*100)
    c2 = c2.reshape(16, B, 10, 10)

    # pool2
    p2 = _pool2x2_cnhw(c2)                                           # (16,B,5,5)

    # flatten exactly like torch .view(-1, 400) on NCHW: feature = (c,h,w)
    feat = p2.transpose(1, 0, 2, 3).reshape(B, 16 * 5 * 5)           # (B,400)

    # fused FC stack: Linear+ReLU, Linear+ReLU, Linear
    return fc_stack(feat, p)


def init_params(key):
    ks = jax.random.split(key, 10)

    def dense(k, shape, fan_in):
        return (jax.random.normal(k, shape, jnp.float32) /
                jnp.sqrt(fan_in)).astype(jnp.float32)

    return {
        # Conv2d(1, 6, kernel_size=5, padding=2)
        "w1": dense(ks[0], (6, 1, 5, 5), 1 * 5 * 5),
        "b1": dense(ks[1], (6,), 1 * 5 * 5),
        # Conv2d(6, 16, kernel_size=5)
        "w3": dense(ks[2], (16, 6, 5, 5), 6 * 5 * 5),
        "b3": dense(ks[3], (16,), 6 * 5 * 5),
        # Linear(400, 120)   (PyTorch weight layout: (out, in))
        "w5": dense(ks[4], (120, 400), 400),
        "b5": dense(ks[5], (120,), 400),
        # Linear(120, 84)
        "w6": dense(ks[6], (84, 120), 120),
        "b6": dense(ks[7], (84,), 120),
        # Linear(84, 10)
        "w7": dense(ks[8], (10, 84), 84),
        "b7": dense(ks[9], (10,), 84),
    }


# ----------------------------------------------------------------------------
# Pure-JAX reference for a sanity check
# ----------------------------------------------------------------------------
def forward_ref(x, p):
    def conv(x, w, b, pad):
        y = jax.lax.conv_general_dilated(
            x, w, window_strides=(1, 1), padding=[(pad, pad), (pad, pad)],
            dimension_numbers=("NCHW", "OIHW", "NCHW"),
            precision=jax.lax.Precision.HIGHEST)
        return y + b[None, :, None, None]

    def pool(x):
        return jax.lax.reduce_window(
            x, -jnp.inf, jax.lax.max, (1, 1, 2, 2), (1, 1, 2, 2), "VALID")

    x = jax.nn.relu(conv(x, p["w1"], p["b1"], 2))
    x = pool(x)
    x = jax.nn.relu(conv(x, p["w3"], p["b3"], 0))
    x = pool(x)
    x = x.reshape(x.shape[0], -1)
    x = jax.nn.relu(x @ p["w5"].T + p["b5"])
    x = jax.nn.relu(x @ p["w6"].T + p["b6"])
    return x @ p["w7"].T + p["b7"]


if __name__ == "__main__":
    key = jax.random.PRNGKey(0)
    k_in, k_p = jax.random.split(key)
    # Input must be (B, 1, 28, 28) so the flatten yields 16*5*5 = 400 features.
    x = jax.random.normal(k_in, (2, 1, 28, 28), jnp.float32)
    params = init_params(k_p)

    fwd = jax.jit(forward)
    out = jax.block_until_ready(fwd(x, params))
    ref = jax.block_until_ready(forward_ref(x, params))

    assert out.shape == (2, 10), out.shape
    assert jnp.allclose(out, ref, rtol=1e-2, atol=1e-2), (
        "Pallas forward mismatch vs reference")
    print("KERNEL_OK")
</pallas_src>

<mosaic_0001>
module attributes {stable_mosaic.version = 11 : i64} {
  func.func @_matmul_t_kernel(%arg0: i32, %arg1: memref<8x32xf32, #tpu.memory_space<vmem>>, %arg2: memref<32x512xf32, #tpu.memory_space<vmem>>, %arg3: memref<8x1xf32, #tpu.memory_space<vmem>>, %arg4: memref<8x512xf32, #tpu.memory_space<vmem>>) attributes {dimension_semantics = [#tpu.dimension_semantics<parallel>], iteration_bounds = array<i64: 4>, scalar_prefetch = 0 : i64, scratch_operands = 0 : i64, tpu.core_type = #tpu.core_type<tc>, window_params = [{pipeline_mode = #tpu.pipeline_mode<synchronous>, transform_indices = @transform_0, window_bounds = array<i64: 8, 32>}, {transform_indices = @transform_1, window_bounds = array<i64: 32, 512>}, {pipeline_mode = #tpu.pipeline_mode<synchronous>, transform_indices = @transform_2, window_bounds = array<i64: 8, 1>}, {transform_indices = @transform_3, window_bounds = array<i64: 8, 512>}]} {
    %c0 = arith.constant 0 : index
    %c0_0 = arith.constant 0 : index
    %0 = vector.load %arg1[%c0, %c0_0] : memref<8x32xf32, #tpu.memory_space<vmem>>, vector<8x32xf32>
    %c0_1 = arith.constant 0 : index
    %c0_2 = arith.constant 0 : index
    %1 = vector.load %arg2[%c0_1, %c0_2] : memref<32x512xf32, #tpu.memory_space<vmem>>, vector<32x512xf32>
    %cst = arith.constant dense<0.000000e+00> : vector<8x512xf32>
    %2 = tpu.matmul %0, %1, %cst {dimension_numbers = #tpu.dot_dimension_numbers<[1], [0], [0], [1], [0, 0, 1, 1], [], []>} : vector<8x32xf32>, vector<32x512xf32>, vector<8x512xf32> -> vector<8x512xf32>
    %c0_3 = arith.constant 0 : index
    %c0_4 = arith.constant 0 : index
    %3 = vector.load %arg3[%c0_3, %c0_4] : memref<8x1xf32, #tpu.memory_space<vmem>>, vector<8x1xf32>
    %4 = vector.broadcast %3 : vector<8x1xf32> to vector<8x512xf32>
    %5 = arith.addf %2, %4 : vector<8x512xf32>
    %cst_5 = arith.constant 0.000000e+00 : f32
    %6 = vector.broadcast %cst_5 : f32 to vector<8x512xf32>
    %7 = arith.maximumf %5, %6 : vector<8x512xf32>
    %c0_6 = arith.constant 0 : index
    %c0_7 = arith.constant 0 : index
    %8 = vector.load %arg4[%c0_6, %c0_7] : memref<8x512xf32, #tpu.memory_space<vmem>>, vector<8x512xf32>
    tpu.vector_store %arg4[%c0_6, %c0_7], %7 {strides = array<i32>} : memref<8x512xf32, #tpu.memory_space<vmem>>, vector<8x512xf32>,
    return
  }
  func.func @transform_0(%arg0: i32) -> (i32, i32) {
    %c0_i32 = arith.constant 0 : i32
    %c0_i32_0 = arith.constant 0 : i32
    %c0_i32_1 = arith.constant 0 : i32
    return %c0_i32, %c0_i32_0 : i32, i32
  }
  func.func @transform_1(%arg0: i32) -> (i32, i32) {
    %c0_i32 = arith.constant 0 : i32
    %c0_i32_0 = arith.constant 0 : i32
    return %c0_i32, %arg0 : i32, i32
  }
  func.func @transform_2(%arg0: i32) -> (i32, i32) {
    %c0_i32 = arith.constant 0 : i32
    %c0_i32_0 = arith.constant 0 : i32
    %c0_i32_1 = arith.constant 0 : i32
    return %c0_i32, %c0_i32_0 : i32, i32
  }
  func.func @transform_3(%arg0: i32) -> (i32, i32) {
    %c0_i32 = arith.constant 0 : i32
    %c0_i32_0 = arith.constant 0 : i32
    return %c0_i32, %arg0 : i32, i32
  }
}

module attributes {stable_mosaic.version = 11 : i64} {
  func.func @_matmul_t_kernel(%arg0: i32, %arg1: memref<16x152xf32, #tpu.memory_space<vmem>>, %arg2: memref<152x256xf32, #tpu.memory_space<vmem>>, %arg3: memref<16x1xf32, #tpu.memory_space<vmem>>, %arg4: memref<16x256xf32, #tpu.memory_space<vmem>>) attributes {dimension_semantics = [#tpu.dimension_semantics<parallel>], iteration_bounds = array<i64: 1>, scalar_prefetch = 0 : i64, scratch_operands = 0 : i64, tpu.core_type = #tpu.core_type<tc>, window_params = [{pipeline_mode = #tpu.pipeline_mode<synchronous>, transform_indices = @transform_0, window_bounds = array<i64: 16, 152>}, {transform_indices = @transform_1, window_bounds = array<i64: 152, 256>}, {pipeline_mode = #tpu.pipeline_mode<synchronous>, transform_indices = @transform_2, window_bounds = array<i64: 16, 1>}, {transform_indices = @transform_3, window_bounds = array<i64: 16, 256>}]} {
    %c0 = arith.constant 0 : index
    %c0_0 = arith.constant 0 : index
    %0 = vector.load %arg1[%c0, %c0_0] : memref<16x152xf32, #tpu.memory_space<vmem>>, vector<16x152xf32>
    %c0_1 = arith.constant 0 : index
    %c0_2 = arith.constant 0 : index
    %1 = vector.load %arg2[%c0_1, %c0_2] : memref<152x256xf32, #tpu.memory_space<vmem>>, vector<152x256xf32>
    %cst = arith.constant dense<0.000000e+00> : vector<16x256xf32>
    %2 = tpu.matmul %0, %1, %cst {dimension_numbers = #tpu.dot_dimension_numbers<[1], [0], [0], [1], [0, 0, 1, 1], [], []>} : vector<16x152xf32>, vector<152x256xf32>, vector<16x256xf32> -> vector<16x256xf32>
    %c0_3 = arith.constant 0 : index
    %c0_4 = arith.constant 0 : index
    %3 = vector.load %arg3[%c0_3, %c0_4] : memref<16x1xf32, #tpu.memory_space<vmem>>, vector<16x1xf32>
    %4 = vector.broadcast %3 : vector<16x1xf32> to vector<16x256xf32>
    %5 = arith.addf %2, %4 : vector<16x256xf32>
    %cst_5 = arith.constant 0.000000e+00 : f32
    %6 = vector.broadcast %cst_5 : f32 to vector<16x256xf32>
    %7 = arith.maximumf %5, %6 : vector<16x256xf32>
    %c0_6 = arith.constant 0 : index
    %c0_7 = arith.constant 0 : index
    %8 = vector.load %arg4[%c0_6, %c0_7] : memref<16x256xf32, #tpu.memory_space<vmem>>, vector<16x256xf32>
    tpu.vector_store %arg4[%c0_6, %c0_7], %7 {strides = array<i32>} : memref<16x256xf32, #tpu.memory_space<vmem>>, vector<16x256xf32>,
    return
  }
  func.func @transform_0(%arg0: i32) -> (i32, i32) {
    %c0_i32 = arith.constant 0 : i32
    %c0_i32_0 = arith.constant 0 : i32
    %c0_i32_1 = arith.constant 0 : i32
    return %c0_i32, %c0_i32_0 : i32, i32
  }
  func.func @transform_1(%arg0: i32) -> (i32, i32) {
    %c0_i32 = arith.constant 0 : i32
    %c0_i32_0 = arith.constant 0 : i32
    return %c0_i32, %arg0 : i32, i32
  }
  func.func @transform_2(%arg0: i32) -> (i32, i32) {
    %c0_i32 = arith.constant 0 : i32
    %c0_i32_0 = arith.constant 0 : i32
    %c0_i32_1 = arith.constant 0 : i32
    return %c0_i32, %c0_i32_0 : i32, i32
  }
  func.func @transform_3(%arg0: i32) -> (i32, i32) {
    %c0_i32 = arith.constant 0 : i32
    %c0_i32_0 = arith.constant 0 : i32
    return %c0_i32, %arg0 : i32, i32
  }
}

module attributes {stable_mosaic.version = 11 : i64} {
  func.func @_fc_stack_kernel(%arg0: i32, %arg1: memref<8x400xf32, #tpu.memory_space<vmem>>, %arg2: memref<400x128xf32, #tpu.memory_space<vmem>>, %arg3: memref<1x128xf32, #tpu.memory_space<vmem>>, %arg4: memref<128x128xf32, #tpu.memory_space<vmem>>, %arg5: memref<1x128xf32, #tpu.memory_space<vmem>>, %arg6: memref<128x128xf32, #tpu.memory_space<vmem>>, %arg7: memref<1x128xf32, #tpu.memory_space<vmem>>, %arg8: memref<8x128xf32, #tpu.memory_space<vmem>>) attributes {dimension_semantics = [#tpu.dimension_semantics<parallel>], iteration_bounds = array<i64: 1>, scalar_prefetch = 0 : i64, scratch_operands = 0 : i64, tpu.core_type = #tpu.core_type<tc>, window_params = [{transform_indices = @transform_0, window_bounds = array<i64: 8, 400>}, {pipeline_mode = #tpu.pipeline_mode<synchronous>, transform_indices = @transform_1, window_bounds = array<i64: 400, 128>}, {pipeline_mode = #tpu.pipeline_mode<synchronous>, transform_indices = @transform_2, window_bounds = array<i64: 1, 128>}, {pipeline_mode = #tpu.pipeline_mode<synchronous>, transform_indices = @transform_3, window_bounds = array<i64: 128, 128>}, {pipeline_mode = #tpu.pipeline_mode<synchronous>, transform_indices = @transform_4, window_bounds = array<i64: 1, 128>}, {pipeline_mode = #tpu.pipeline_mode<synchronous>, transform_indices = @transform_5, window_bounds = array<i64: 128, 128>}, {pipeline_mode = #tpu.pipeline_mode<synchronous>, transform_indices = @transform_6, window_bounds = array<i64: 1, 128>}, {transform_indices = @transform_7, window_bounds = array<i64: 8, 128>}]} {
    %c0 = arith.constant 0 : index
    %c0_0 = arith.constant 0 : index
    %0 = vector.load %arg1[%c0, %c0_0] : memref<8x400xf32, #tpu.memory_space<vmem>>, vector<8x400xf32>
    %c0_1 = arith.constant 0 : index
    %c0_2 = arith.constant 0 : index
    %1 = vector.load %arg2[%c0_1, %c0_2] : memref<400x128xf32, #tpu.memory_space<vmem>>, vector<400x128xf32>
    %cst = arith.constant dense<0.000000e+00> : vector<8x128xf32>
    %2 = tpu.matmul %0, %1, %cst {dimension_numbers = #tpu.dot_dimension_numbers<[1], [0], [0], [1], [0, 0, 1, 1], [], []>} : vector<8x400xf32>, vector<400x128xf32>, vector<8x128xf32> -> vector<8x128xf32>
    %c0_3 = arith.constant 0 : index
    %c0_4 = arith.constant 0 : index
    %3 = vector.load %arg3[%c0_3, %c0_4] : memref<1x128xf32, #tpu.memory_space<vmem>>, vector<1x128xf32>
    %4 = vector.broadcast %3 : vector<1x128xf32> to vector<8x128xf32>
    %5 = arith.addf %2, %4 : vector<8x128xf32>
    %cst_5 = arith.constant 0.000000e+00 : f32
    %6 = vector.broadcast %cst_5 : f32 to vector<8x128xf32>
    %7 = arith.maximumf %5, %6 : vector<8x128xf32>
    %c0_6 = arith.constant 0 : index
    %c0_7 = arith.constant 0 : index
    %8 = vector.load %arg4[%c0_6, %c0_7] : memref<128x128xf32, #tpu.memory_space<vmem>>, vector<128x128xf32>
    %cst_8 = arith.constant dense<0.000000e+00> : vector<8x128xf32>
    %9 = tpu.matmul %7, %8, %cst_8 {dimension_numbers = #tpu.dot_dimension_numbers<[1], [0], [0], [1], [0, 0, 1, 1], [], []>} : vector<8x128xf32>, vector<128x128xf32>, vector<8x128xf32> -> vector<8x128xf32>
    %c0_9 = arith.constant 0 : index
    %c0_10 = arith.constant 0 : index
    %10 = vector.load %arg5[%c0_9, %c0_10] : memref<1x128xf32, #tpu.memory_space<vmem>>, vector<1x128xf32>
    %11 = vector.broadcast %10 : vector<1x128xf32> to vector<8x128xf32>
    %12 = arith.addf %9, %11 : vector<8x128xf32>
    %cst_11 = arith.constant 0.000000e+00 : f32
    %13 = vector.broadcast %cst_11 : f32 to vector<8x128xf32>
    %14 = arith.maximumf %12, %13 : vector<8x128xf32>
    %c0_12 = arith.constant 0 : index
    %c0_13 = arith.constant 0 : index
    %15 = vector.load %arg6[%c0_12, %c0_13] : memref<128x128xf32, #tpu.memory_space<vmem>>, vector<128x128xf32>
    %cst_14 = arith.constant dense<0.000000e+00> : vector<8x128xf32>
    %16 = tpu.matmul %14, %15, %cst_14 {dimension_numbers = #tpu.dot_dimension_numbers<[1], [0], [0], [1], [0, 0, 1, 1], [], []>} : vector<8x128xf32>, vector<128x128xf32>, vector<8x128xf32> -> vector<8x128xf32>
    %c0_15 = arith.constant 0 : index
    %c0_16 = arith.constant 0 : index
    %17 = vector.load %arg7[%c0_15, %c0_16] : memref<1x128xf32, #tpu.memory_space<vmem>>, vector<1x128xf32>
    %18 = vector.broadcast %17 : vector<1x128xf32> to vector<8x128xf32>
    %19 = arith.addf %16, %18 : vector<8x128xf32>
    %c0_17 = arith.constant 0 : index
    %c0_18 = arith.constant 0 : index
    %20 = vector.load %arg8[%c0_17, %c0_18] : memref<8x128xf32, #tpu.memory_space<vmem>>, vector<8x128xf32>
    tpu.vector_store %arg8[%c0_17, %c0_18], %19 {strides = array<i32>} : memref<8x128xf32, #tpu.memory_space<vmem>>, vector<8x128xf32>,
    return
  }
  func.func @transform_0(%arg0: i32) -> (i32, i32) {
    %c0_i32 = arith.constant 0 : i32
    %c0_i32_0 = arith.constant 0 : i32
    return %arg0, %c0_i32 : i32, i32
  }
  func.func @transform_1(%arg0: i32) -> (i32, i32) {
    %c0_i32 = arith.constant 0 : i32
    %c0_i32_0 = arith.constant 0 : i32
    %c0_i32_1 = arith.constant 0 : i32
    return %c0_i32, %c0_i32_0 : i32, i32
  }
  func.func @transform_2(%arg0: i32) -> (i32, i32) {
    %c0_i32 = arith.constant 0 : i32
    %c0_i32_0 = arith.constant 0 : i32
    %c0_i32_1 = arith.constant 0 : i32
    return %c0_i32, %c0_i32_0 : i32, i32
  }
  func.func @transform_3(%arg0: i32) -> (i32, i32) {
    %c0_i32 = arith.constant 0 : i32
    %c0_i32_0 = arith.constant 0 : i32
    %c0_i32_1 = arith.constant 0 : i32
    return %c0_i32, %c0_i32_0 : i32, i32
  }
  func.func @transform_4(%arg0: i32) -> (i32, i32) {
    %c0_i32 = arith.constant 0 : i32
    %c0_i32_0 = arith.constant 0 : i32
    %c0_i32_1 = arith.constant 0 : i32
    return %c0_i32, %c0_i32_0 : i32, i32
  }
  func.func @transform_5(%arg0: i32) -> (i32, i32) {
    %c0_i32 = arith.constant 0 : i32
    %c0_i32_0 = arith.constant 0 : i32
    %c0_i32_1 = arith.constant 0 : i32
    return %c0_i32, %c0_i32_0 : i32, i32
  }
  func.func @transform_6(%arg0: i32) -> (i32, i32) {
    %c0_i32 = arith.constant 0 : i32
    %c0_i32_0 = arith.constant 0 : i32
    %c0_i32_1 = arith.constant 0 : i32
    return %c0_i32, %c0_i32_0 : i32, i32
  }
  func.func @transform_7(%arg0: i32) -> (i32, i32) {
    %c0_i32 = arith.constant 0 : i32
    %c0_i32_0 = arith.constant 0 : i32
    return %arg0, %c0_i32 : i32, i32
  }
}

</mosaic_0001>

<llo_original>
// kernel: forward.3
$region0: #{forward.3}
  #allocation0 [shape = 'u32[]', space=smem, size = 0x4, offset = 0x4, fixed_abs, tag = 'smem constant byte address 0x4 - core index']
  #allocation1 [shape = 'u32[144,128]{1,0:T(1,128)}', space=vmem, size = 0x12000, scoped, tag = 'internal scratch']
  %s0 = inlined_call_operand.vmem [shape: f32[8,32], index: 0, kind: input, shape index: {}]
  %s1 = inlined_call_operand.vmem [shape: f32[32,2048], index: 1, kind: input, shape index: {}]
  %s2 = inlined_call_operand.vmem [shape: f32[8,1], index: 2, kind: input, shape index: {}]
  %s3 = inlined_call_operand.vmem [shape: f32[8,2048], index: 3, kind: output, shape index: {}]
  %s4 = sld [smem:[#allocation0]]
  $region68: #{forward.3} parent=0
    _
  %s6 = ssub.s32 1, %s4
  %s7 = scalar_select 0, %s6, %s4
  $region1: #{forward.3} parent=0
    #allocation2 [shape = 'u8[131072]{0}', space=vmem, size = 0x20000, scoped, tag = 'input window, operand 1']
    loop: start=0, step=1, limit=6
    $region2: #{forward.3} parent=1 // loop_pre_header
      _
    $region3: #{forward.3} parent=1 // loop_header
      %s9 = sphi 0, %s13
      %p10 = scmp.ge.s32.totalorder %s9, 6
      %s17 = sphi 0, %s17
      %s19 = sphi 0, %s17
      %s20 = sphi 0, %s19
      %s34 = sphi 0, %s20
      %s40 = sphi 0, %s42
      %s43 = sphi 0, %s40
      %s44 = sphi 0, %s43
      %s60 = sphi 0, %s44
      %s64 = sphi 0, %s64
      %s66 = sphi 0, %s64
      %s67 = sphi 0, %s66
      %s81 = sphi 0, %s67
      %s87 = sphi 0, %s89
      %s90 = sphi 0, %s87
      %s91 = sphi 0, %s90
      %s107 = sphi 0, %s91
    $region4: #{forward.3} parent=1 // loop_header_branch
      %12 = sbr.rel (%p10) target = $region8
    $region5: #{forward.3} parent=1 // loop_body
      %s14 = ssub.s32 %s9, 1
      %s15 = ssub.s32 %s9, 2
      %s16 = sadd.s32 %s9, 1
      %s18 = sadd.s32 %s17, 1
      %p21 = scmp.eq.s32.totalorder %s9, 3
      %p22 = scmp.ne.s32.totalorder %s17, %s19
      %p23 = scmp.eq.s32.totalorder %s9, 0
      %p24 = por %p22, %p23
      %p25 = scmp.ne.s32.totalorder %s17, %s19
      %p26 = scmp.eq.s32.totalorder %s14, 3
      %p27 = por %p25, %p26
      %p28 = scmp.ne.s32.totalorder %s19, %s20
      %p29 = scmp.eq.s32.totalorder %s14, 0
      %p30 = por %p28, %p29
      %p31 = scmp.ne.s32.totalorder %s19, %s20
      %p32 = scmp.eq.s32.totalorder %s15, 3
      %p33 = por %p31, %p32
      %p35 = scmp.ne.s32.totalorder %s20, %s34
      %p36 = scmp.eq.s32.totalorder %s15, 0
      %p37 = por %p35, %p36
      %s38 = ssub.s32 %s9, %s16
      %p39 = scmp.eq.s32.totalorder %s38, 0
      %s41 = sadd.s32 %s40, 1
      %s42 = scalar_select %p39, %s40, %s41
      %p45 = pneg %p39
      %p46 = scmp.eq.s32.totalorder %s9, 3
      %p47 = por %p45, %p46
      %p48 = scmp.ne.s32.totalorder %s40, %s43
      %p49 = scmp.eq.s32.totalorder %s9, 0
      %p50 = por %p48, %p49
      %p51 = scmp.ne.s32.totalorder %s40, %s43
      %p52 = scmp.eq.s32.totalorder %s14, 3
      %p53 = por %p51, %p52
      %p54 = scmp.ne.s32.totalorder %s43, %s44
      %p55 = scmp.eq.s32.totalorder %s14, 0
      %p56 = por %p54, %p55
      %p57 = scmp.ne.s32.totalorder %s43, %s44
      %p58 = scmp.eq.s32.totalorder %s15, 3
      %p59 = por %p57, %p58
      %p61 = scmp.ne.s32.totalorder %s44, %s60
      %p62 = scmp.eq.s32.totalorder %s15, 0
      %p63 = por %p61, %p62
      %s65 = sadd.s32 %s64, 1
      %p68 = scmp.eq.s32.totalorder %s9, 3
      %p69 = scmp.ne.s32.totalorder %s64, %s66
      %p70 = scmp.eq.s32.totalorder %s9, 0
      %p71 = por %p69, %p70
      %p72 = scmp.ne.s32.totalorder %s64, %s66
      %p73 = scmp.eq.s32.totalorder %s14, 3
      %p74 = por %p72, %p73
      %p75 = scmp.ne.s32.totalorder %s66, %s67
      %p76 = scmp.eq.s32.totalorder %s14, 0
      %p77 = por %p75, %p76
      %p78 = scmp.ne.s32.totalorder %s66, %s67
      %p79 = scmp.eq.s32.totalorder %s15, 3
      %p80 = por %p78, %p79
      %p82 = scmp.ne.s32.totalorder %s67, %s81
      %p83 = scmp.eq.s32.totalorder %s15, 0
      %p84 = por %p82, %p83
      %s85 = ssub.s32 %s9, %s16
      %p86 = scmp.eq.s32.totalorder %s85, 0
      %s88 = sadd.s32 %s87, 1
      %s89 = scalar_select %p86, %s87, %s88
      %p92 = pneg %p86
      %p93 = scmp.eq.s32.totalorder %s9, 3
      %p94 = por %p92, %p93
      %p95 = scmp.ne.s32.totalorder %s87, %s90
      %p96 = scmp.eq.s32.totalorder %s9, 0
      %p97 = por %p95, %p96
      %p98 = scmp.ne.s32.totalorder %s87, %s90
      %p99 = scmp.eq.s32.totalorder %s14, 3
      %p100 = por %p98, %p99
      %p101 = scmp.ne.s32.totalorder %s90, %s91
      %p102 = scmp.eq.s32.totalorder %s14, 0
      %p103 = por %p101, %p102
      %p104 = scmp.ne.s32.totalorder %s90, %s91
      %p105 = scmp.eq.s32.totalorder %s15, 3
      %p106 = por %p104, %p105
      %p108 = scmp.ne.s32.totalorder %s91, %s107
      %p109 = scmp.eq.s32.totalorder %s15, 0
      %p110 = por %p108, %p109
      %p111 = scmp.le.s32.totalorder 1, %s9
      %p112 = scmp.lt.s32.totalorder %s9, 5
      %p113 = pnand %p111, %p112
      %p114 = pneg %p113
      // Predicated region
      $region9: #{forward.3} parent=5 // pred_check
        _
      $region10: #{forward.3} parent=5 // pred_check_branch
        %116 = sbr.rel (%p113) target = $region12
      $region11: #{forward.3} parent=5 // pred_region
        %s117 = ssub.s32 %s9, 1
        // Predicated region
        $region13: #{forward.3} parent=11 // pred_check
          %p118 = pneg %p30
        $region14: #{forward.3} parent=11 // pred_check_branch
          %120 = sbr.rel (%p118) target = $region16
        $region15: #{forward.3} parent=11 // pred_region
          _
        $region16: #{forward.3} parent=11 // pred_fallthru
          _
        // Predicated region
        $region17: #{forward.3} parent=11 // pred_check
          %p121 = pneg %p77
        $region18: #{forward.3} parent=11 // pred_check_branch
          %123 = sbr.rel (%p121) target = $region20
        $region19: #{forward.3} parent=11 // pred_region
          _
        $region20: #{forward.3} parent=11 // pred_fallthru
          _
      $region12: #{forward.3} parent=5 // pred_fallthru
        _
      %p124 = scmp.lt.s32.totalorder %s9, 4
      // Predicated region
      $region21: #{forward.3} parent=5 // pred_check
        %p125 = pneg %p124
      $region22: #{forward.3} parent=5 // pred_check_branch
        %127 = sbr.rel (%p125) target = $region24
      $region23: #{forward.3} parent=5 // pred_region
        // Predicated region
        $region25: #{forward.3} parent=23 // pred_check
          %p128 = pneg %p50
        $region26: #{forward.3} parent=23 // pred_check_branch
          %130 = sbr.rel (%p128) target = $region28
        $region27: #{forward.3} parent=23 // pred_region
          %s131 = sand.u32 %s40, 1
          %s132 = sand.u32 %s40, 1
          %s133 = smul.addr %s132, 128
          %s134 = scalar_lea.vmem [#allocation2], %s133
          %s135 = smul.u32 4, %s9
          %s136 = smul.addr %s135, 8
          %s137 = scalar_lea.vmem %s1, %s136
          // Predicated region
          $region29: #{forward.3} parent=27 // pred_check
            _
          $region30: #{forward.3} parent=27 // pred_check_branch
            %139 = sbr.rel (0) target = $region32
          $region31: #{forward.3} parent=27 // pred_region
            // Predicated region
            $region33: #{forward.3} parent=31 // pred_check
              _
            $region34: #{forward.3} parent=31 // pred_check_branch
              %141 = sbr.rel (0) target = $region36
            $region35: #{forward.3} parent=31 // pred_region
              loop: start=0, step=1, limit=1
              $region37: #{forward.3} parent=35 // loop_pre_header
                _
              $region38: #{forward.3} parent=35 // loop_header
                %s143 = sphi 0, %s147
                %p144 = scmp.ge.s32.totalorder %s143, 1
                %s148 = sphi %s137, %s137
                %s149 = sphi %s134, %s134
              $region39: #{forward.3} parent=35 // loop_header_branch
                %146 = sbr.rel (%p144) target = $region43
              $region40: #{forward.3} parent=35 // loop_body
                %v150 = vld [vmem:[%s148] sm:$0xff]
                %151 = vst [vmem:[%s149] sm:$0xff] %v150
                %v152 = vld [vmem:[%s148 + $0x8] sm:$0xff]
                %153 = vst [vmem:[%s149 + $0x8] sm:$0xff] %v152
                %v154 = vld [vmem:[%s148 + $0x10] sm:$0xff]
                %155 = vst [vmem:[%s149 + $0x10] sm:$0xff] %v154
                %v156 = vld [vmem:[%s148 + $0x18] sm:$0xff]
                %157 = vst [vmem:[%s149 + $0x18] sm:$0xff] %v156
                %v158 = vld [vmem:[%s148 + $0x80] sm:$0xff]
                %159 = vst [vmem:[%s149 + $0x20] sm:$0xff] %v158
                %v160 = vld [vmem:[%s148 + $0x88] sm:$0xff]
                %161 = vst [vmem:[%s149 + $0x28] sm:$0xff] %v160
                %v162 = vld [vmem:[%s148 + $0x90] sm:$0xff]
                %163 = vst [vmem:[%s149 + $0x30] sm:$0xff] %v162
                %v164 = vld [vmem:[%s148 + $0x98] sm:$0xff]
                %165 = vst [vmem:[%s149 + $0x38] sm:$0xff] %v164
                %v166 = vld [vmem:[%s148 + $0x100] sm:$0xff]
                %167 = vst [vmem:[%s149 + $0x40] sm:$0xff] %v166
                %v168 = vld [vmem:[%s148 + $0x108] sm:$0xff]
                %169 = vst [vmem:[%s149 + $0x48] sm:$0xff] %v168
                %v170 = vld [vmem:[%s148 + $0x110] sm:$0xff]
                %171 = vst [vmem:[%s149 + $0x50] sm:$0xff] %v170
                %v172 = vld [vmem:[%s148 + $0x118] sm:$0xff]
                %173 = vst [vmem:[%s149 + $0x58] sm:$0xff] %v172
                %v174 = vld [vmem:[%s148 + $0x180] sm:$0xff]
                %175 = vst [vmem:[%s149 + $0x60] sm:$0xff] %v174
                %v176 = vld [vmem:[%s148 + $0x188] sm:$0xff]
                %177 = vst [vmem:[%s149 + $0x68] sm:$0xff] %v176
                %v178 = vld [vmem:[%s148 + $0x190] sm:$0xff]
                %179 = vst [vmem:[%s149 + $0x70] sm:$0xff] %v178
                %v180 = vld [vmem:[%s148 + $0x198] sm:$0xff]
                %181 = vst [vmem:[%s149 + $0x78] sm:$0xff] %v180
              $region41: #{forward.3} parent=35 // loop_footer
                %s147 = sadd.s32 1, %s143
              $region42: #{forward.3} parent=35 // loop_footer_branch
                %142 = sbr.rel target = $region38
              $region43: #{forward.3} parent=35 // loop_exit
                _
            $region36: #{forward.3} parent=31 // pred_fallthru
              _
            // Predicated region
            $region44: #{forward.3} parent=31 // pred_check
              _
            $region45: #{forward.3} parent=31 // pred_check_branch
              %183 = sbr.rel target = $region47
            $region46: #{forward.3} parent=31 // pred_region
              _
            $region47: #{forward.3} parent=31 // pred_fallthru
              _
          $region32: #{forward.3} parent=27 // pred_fallthru
            _
          %184 = vnop
        $region28: #{forward.3} parent=23 // pred_fallthru
          _
      $region24: #{forward.3} parent=5 // pred_fallthru
        _
      %p185 = scmp.le.s32.totalorder 1, %s9
      %p186 = scmp.lt.s32.totalorder %s9, 5
      %p187 = pnand %p185, %p186
      %p188 = pneg %p187
      // Predicated region
      $region48: #{forward.3} parent=5 // pred_check
        _
      $region49: #{forward.3} parent=5 // pred_check_branch
        %190 = sbr.rel (%p187) target = $region51
      $region50: #{forward.3} parent=5 // pred_region
        %s191 = ssub.s32 %s9, 1
        %s192 = sand.u32 %s43, 1
        %s193 = sand.u32 %s43, 1
        %s194 = smul.addr %s193, 128
        %s195 = scalar_lea.vmem [#allocation2], %s194
        // Predicated region
        $region52: #{forward.3} parent=50 // pred_check
          %p196 = pneg %p56
        $region53: #{forward.3} parent=50 // pred_check_branch
          %198 = sbr.rel (%p196) target = $region55
        $region54: #{forward.3} parent=50 // pred_region
          _
        $region55: #{forward.3} parent=50 // pred_fallthru
          _
        %p199 = pneg %p30
        %p200 = pneg %p27
        %s201 = sand.u32 %s43, 1
        %s202 = sand.u32 %s43, 1
        %s203 = smul.addr %s202, 128
        %s204 = scalar_lea.vmem [#allocation2], %s203
        %p205 = pneg %p56
        %p206 = pneg %p53
        %p207 = pneg %p77
        %p208 = pneg %p74
        %p209 = pneg %p103
        %p210 = pneg %p100
        %s211 = smul.u32 4, %s14
        %p212 = scmp.lt.s32.totalorder %s211, 15
        %s213 = scalar_select %p212, %s211, 15
        %s214 = smul.addr %s213, 8
        %s215 = scalar_lea.vmem %s3, %s214
        %s216 = smul.u32 4, %s14
        %s217 = smul.u32 4, %s14
        %p218 = scmp.lt.s32.totalorder %s217, 15
        %s219 = scalar_select %p218, %s217, 15
        %s220 = smul.addr %s219, 8
        %s221 = scalar_lea.vmem %s3, %s220
        %s222 = smul.u32 4, %s14
        %v223 = vld [vmem:[%s0] sm:$0xff]
        %v224 = vld [vmem:[%s195] sm:$0xff]
        %v225 = vld [vmem:[%s195 + $0x8] sm:$0xff]
        %v226 = vld [vmem:[%s195 + $0x10] sm:$0xff]
        %v227 = vld [vmem:[%s195 + $0x18] sm:$0xff]
        %v228 = vld [vmem:[%s195 + $0x20] sm:$0xff]
        %v229 = vld [vmem:[%s195 + $0x28] sm:$0xff]
        %v230 = vld [vmem:[%s195 + $0x30] sm:$0xff]
        %v231 = vld [vmem:[%s195 + $0x38] sm:$0xff]
        %v232 = vld [vmem:[%s195 + $0x40] sm:$0xff]
        %v233 = vld [vmem:[%s195 + $0x48] sm:$0xff]
        %v234 = vld [vmem:[%s195 + $0x50] sm:$0xff]
        %v235 = vld [vmem:[%s195 + $0x58] sm:$0xff]
        %v236 = vld [vmem:[%s195 + $0x60] sm:$0xff]
        %v237 = vld [vmem:[%s195 + $0x68] sm:$0xff]
        %v238 = vld [vmem:[%s195 + $0x70] sm:$0xff]
        %v239 = vld [vmem:[%s195 + $0x78] sm:$0xff]
        %v240 = vld [vmem:[%s2] sm:$0xff]
        %242 = vset.pattern.permute.xlu0 0
        %243 = vperm.xlu0 %242, %v240
        %v244 = vpop.permute.xlu0 %243
        %vm246 = vcmask 261120
        %v248 = vsel %vm246, %v223, 0
        %250 = vmatprep.subr.mxu0 %v225
        %251 = vmatpush1.msra.mxu0 %v224
        %252 = vmatprep.subr.mxu0 %v229
        %253 = vmatpush1.msra.mxu0 %v228
        %254 = vmatprep.subr.mxu0 %v233
        %255 = vmatpush1.msra.mxu0 %v232
        %256 = vmatprep.subr.mxu0 %v237
        %257 = vmatpush1.msra.mxu0 %v236
        %258 = vmatprep.subr.mxu0 0.0
        %259 = vmatpush1.msra.mxu0 0.0
        %260 = vmatprep.subr.mxu0 0.0
        %261 = vmatpush1.msra.mxu0 0.0
        %262 = vmatprep.subr.mxu0 0.0
        %263 = vmatpush1.msra.mxu0 0.0
        %264 = vmatprep.subr.mxu0 0.0
        %265 = vmatpush1.msra.mxu0 0.0
        %266 = vmatprep.subr.mxu0 0.0
        %267 = vmatpush1.msra.mxu0 0.0
        %268 = vmatprep.subr.mxu0 0.0
        %269 = vmatpush1.msra.mxu0 0.0
        %270 = vmatprep.subr.mxu0 0.0
        %271 = vmatpush1.msra.mxu0 0.0
        %272 = vmatprep.subr.mxu0 0.0
        %273 = vmatpush1.msra.mxu0 0.0
        %274 = vmatprep.subr.mxu0 0.0
        %275 = vmatpush1.msra.mxu0 0.0
        %276 = vmatprep.subr.mxu0 0.0
        %277 = vmatpush1.msra.mxu0 0.0
        %278 = vmatprep.subr.mxu0 0.0
        %279 = vmatpush1.msra.mxu0 0.0
        %280 = vmatprep.subr.mxu0 0.0
        %281 = vmatpush1.msra.mxu0 0.0
        %282 = vmatprep.subr.mxu0 0.0
        %283 = vmatpush1.msra.mxu0 0.0
        %284 = vmatprep.subr.mxu0 0.0
        %285 = vmatpush1.msra.mxu0 0.0
        %286 = vmatprep.subr.mxu0 0.0
        %287 = vmatpush1.msra.mxu0 0.0
        %288 = vmatprep.subr.mxu0 0.0
        %289 = vmatpush1.msra.mxu0 0.0
        %290 = vmatprep.subr.mxu0 0.0
        %291 = vmatpush1.msra.mxu0 0.0
        %292 = vmatprep.subr.mxu0 0.0
        %293 = vmatpush1.msra.mxu0 0.0
        %294 = vmatprep.subr.mxu0 0.0
        %295 = vmatpush1.msra.mxu0 0.0
        %296 = vmatprep.subr.mxu0 0.0
        %297 = vmatpush1.msra.mxu0 0.0
        %298 = vmatprep.subr.mxu0 0.0
        %299 = vmatpush1.msra.mxu0 0.0
        %300 = vmatprep.subr.mxu0 0.0
        %301 = vmatpush1.msra.mxu0 0.0
        %302 = vmatprep.subr.mxu0 0.0
        %303 = vmatpush1.msra.mxu0 0.0
        %304 = vmatprep.subr.mxu0 0.0
        %305 = vmatpush1.msra.mxu0 0.0
        %306 = vmatprep.subr.mxu0 0.0
        %307 = vmatpush1.msra.mxu0 0.0
        %308 = vmatprep.subr.mxu0 0.0
        %309 = vmatpush1.msra.mxu0 0.0
        %310 = vmatprep.subr.mxu0 0.0
        %311 = vmatpush1.msra.mxu0 0.0
        %312 = vmatprep.subr.mxu0 0.0
        %313 = vmatpush1.msra.mxu0 0.0
        %314 = vmatprep.mubr.f32.mxu0 0.0
        %315 = vmatmul.mubr.f32.gmra.mrb[0].mxu0 %v248
        %v316 = vpop.f32.mrb[0].mxu0
        %v317 = vadd.f32 %v244, %v316
        %v318 = vpop.f32.mrb[0].mxu0
        %v319 = vadd.f32 %v244, %v318
        %320 = vdwg.mxu0
        %321 = vmatprep.subr.mxu0 %v227
        %322 = vmatpush1.msra.mxu0 %v226
        %323 = vmatprep.subr.mxu0 %v231
        %324 = vmatpush1.msra.mxu0 %v230
        %325 = vmatprep.subr.mxu0 %v235
        %326 = vmatpush1.msra.mxu0 %v234
        %327 = vmatprep.subr.mxu0 %v239
        %328 = vmatpush1.msra.mxu0 %v238
        %329 = vmatprep.subr.mxu0 0.0
        %330 = vmatpush1.msra.mxu0 0.0
        %331 = vmatprep.subr.mxu0 0.0
        %332 = vmatpush1.msra.mxu0 0.0
        %333 = vmatprep.subr.mxu0 0.0
        %334 = vmatpush1.msra.mxu0 0.0
        %335 = vmatprep.subr.mxu0 0.0
        %336 = vmatpush1.msra.mxu0 0.0
        %337 = vmatprep.subr.mxu0 0.0
        %338 = vmatpush1.msra.mxu0 0.0
        %339 = vmatprep.subr.mxu0 0.0
        %340 = vmatpush1.msra.mxu0 0.0
        %341 = vmatprep.subr.mxu0 0.0
        %342 = vmatpush1.msra.mxu0 0.0
        %343 = vmatprep.subr.mxu0 0.0
        %344 = vmatpush1.msra.mxu0 0.0
        %345 = vmatprep.subr.mxu0 0.0
        %346 = vmatpush1.msra.mxu0 0.0
        %347 = vmatprep.subr.mxu0 0.0
        %348 = vmatpush1.msra.mxu0 0.0
        %349 = vmatprep.subr.mxu0 0.0
        %350 = vmatpush1.msra.mxu0 0.0
        %351 = vmatprep.subr.mxu0 0.0
        %352 = vmatpush1.msra.mxu0 0.0
        %353 = vmatprep.subr.mxu0 0.0
        %354 = vmatpush1.msra.mxu0 0.0
        %355 = vmatprep.subr.mxu0 0.0
        %356 = vmatpush1.msra.mxu0 0.0
        %357 = vmatprep.subr.mxu0 0.0
        %358 = vmatpush1.msra.mxu0 0.0
        %359 = vmatprep.subr.mxu0 0.0
        %360 = vmatpush1.msra.mxu0 0.0
        %361 = vmatprep.subr.mxu0 0.0
        %362 = vmatpush1.msra.mxu0 0.0
        %363 = vmatprep.subr.mxu0 0.0
        %364 = vmatpush1.msra.mxu0 0.0
        %365 = vmatprep.subr.mxu0 0.0
        %366 = vmatpush1.msra.mxu0 0.0
        %367 = vmatprep.subr.mxu0 0.0
        %368 = vmatpush1.msra.mxu0 0.0
        %369 = vmatprep.subr.mxu0 0.0
        %370 = vmatpush1.msra.mxu0 0.0
        %371 = vmatprep.subr.mxu0 0.0
        %372 = vmatpush1.msra.mxu0 0.0
        %373 = vmatprep.subr.mxu0 0.0
        %374 = vmatpush1.msra.mxu0 0.0
        %375 = vmatprep.subr.mxu0 0.0
        %376 = vmatpush1.msra.mxu0 0.0
        %377 = vmatprep.subr.mxu0 0.0
        %378 = vmatpush1.msra.mxu0 0.0
        %379 = vmatprep.subr.mxu0 0.0
        %380 = vmatpush1.msra.mxu0 0.0
        %381 = vmatprep.subr.mxu0 0.0
        %382 = vmatpush1.msra.mxu0 0.0
        %383 = vmatprep.subr.mxu0 0.0
        %384 = vmatpush1.msra.mxu0 0.0
        %385 = vmatprep.mubr.f32.mxu0 0.0
        %386 = vmatmul.mubr.f32.gmra.mrb[0].mxu0 %v248
        %v387 = vpop.f32.mrb[0].mxu0
        %v388 = vadd.f32 %v244, %v387
        %v389 = vpop.f32.mrb[0].mxu0
        %v390 = vadd.f32 %v244, %v389
        %391 = vdwg.mxu0
        %v392 = vmax.f32 %v317, 0.0
        %v393 = vmax.f32 %v319, 0.0
        %v394 = vmax.f32 %v388, 0.0
        %v395 = vmax.f32 %v390, 0.0
        %396 = vst [vmem:[%s221] sm:$0xff] %v392
        %397 = vst [vmem:[%s221 + $0x8] sm:$0xff] %v393
        %398 = vst [vmem:[%s221 + $0x10] sm:$0xff] %v394
        %399 = vst [vmem:[%s221 + $0x18] sm:$0xff] %v395
        %s400 = smul.u32 4, %s14
        %p401 = scmp.lt.s32.totalorder %s400, 15
        %s402 = scalar_select %p401, %s400, 15
        %s403 = smul.addr %s402, 8
        %s404 = scalar_lea.vmem %s3, %s403
        // Predicated region
        $region56: #{forward.3} parent=50 // pred_check
          %p405 = pneg %p100
        $region57: #{forward.3} parent=50 // pred_check_branch
          %407 = sbr.rel (%p405) target = $region59
        $region58: #{forward.3} parent=50 // pred_region
          %s408 = smul.u32 4, %s14
        $region59: #{forward.3} parent=50 // pred_fallthru
          _
      $region51: #{forward.3} parent=5 // pred_fallthru
        _
      %p409 = scmp.le.s32.totalorder 2, %s9
      // Predicated region
      $region60: #{forward.3} parent=5 // pred_check
        %p410 = pneg %p409
      $region61: #{forward.3} parent=5 // pred_check_branch
        %412 = sbr.rel (%p410) target = $region63
      $region62: #{forward.3} parent=5 // pred_region
        %s413 = ssub.s32 %s9, 2
        // Predicated region
        $region64: #{forward.3} parent=62 // pred_check
          %p414 = pneg %p106
        $region65: #{forward.3} parent=62 // pred_check_branch
          %416 = sbr.rel (%p414) target = $region67
        $region66: #{forward.3} parent=62 // pred_region
          %s417 = smul.u32 4, %s15
          %p418 = scmp.lt.s32.totalorder %s417, 15
          %s419 = scalar_select %p418, %s417, 15
          %s420 = smul.addr %s419, 8
          %s421 = scalar_lea.vmem %s3, %s420
        $region67: #{forward.3} parent=62 // pred_fallthru
          _
      $region63: #{forward.3} parent=5 // pred_fallthru
        _
    $region6: #{forward.3} parent=1 // loop_footer
      %s13 = sadd.s32 1, %s9
    $region7: #{forward.3} parent=1 // loop_footer_branch
      %8 = sbr.rel target = $region3
    $region8: #{forward.3} parent=1 // loop_exit
      _

// kernel: forward.4
$region0: #{forward.4}
  #allocation0 [shape = 'u32[]', space=smem, size = 0x4, offset = 0x4, fixed_abs, tag = 'smem constant byte address 0x4 - core index']
  #allocation1 [shape = 'u32[144,128]{1,0:T(1,128)}', space=vmem, size = 0x12000, scoped, tag = 'internal scratch']
  %s0 = inlined_call_operand.vmem [shape: f32[16,152], index: 0, kind: input, shape index: {}]
  %s1 = inlined_call_operand.vmem [shape: f32[152,256], index: 1, kind: input, shape index: {}]
  %s2 = inlined_call_operand.vmem [shape: f32[16,1], index: 2, kind: input, shape index: {}]
  %s3 = inlined_call_operand.vmem [shape: f32[16,256], index: 3, kind: output, shape index: {}]
  %s4 = sld [smem:[#allocation0]]
  $region22: #{forward.4} parent=0
    _
  %s6 = ssub.s32 1, %s4
  %s7 = scalar_select 0, %s6, %s4
  // Predicated region
  $region2: #{forward.4} parent=0 // pred_check
    _
  $region3: #{forward.4} parent=0 // pred_check_branch
    %9 = sbr.rel (0) target = $region5
  $region4: #{forward.4} parent=0 // pred_region
    _
  $region5: #{forward.4} parent=0 // pred_fallthru
    _
  // Predicated region
  $region6: #{forward.4} parent=0 // pred_check
    _
  $region7: #{forward.4} parent=0 // pred_check_branch
    %11 = sbr.rel (0) target = $region9
  $region8: #{forward.4} parent=0 // pred_region
    _
  $region9: #{forward.4} parent=0 // pred_fallthru
    _
  // Predicated region
  $region10: #{forward.4} parent=0 // pred_check
    _
  $region11: #{forward.4} parent=0 // pred_check_branch
    %13 = sbr.rel (0) target = $region13
  $region12: #{forward.4} parent=0 // pred_region
    _
  $region13: #{forward.4} parent=0 // pred_fallthru
    _
  %v14 = vld [vmem:[%s0] sm:$0xff]
  %v15 = vld [vmem:[%s0 + $0x8] sm:$0xff]
  %v16 = vld [vmem:[%s0 + $0x10] sm:$0xff]
  %v17 = vld [vmem:[%s0 + $0x18] sm:$0xff]
  %v18 = vld [vmem:[%s1] sm:$0xff]
  %v19 = vld [vmem:[%s1 + $0x8] sm:$0xff]
  %v20 = vld [vmem:[%s1 + $0x10] sm:$0xff]
  %v21 = vld [vmem:[%s1 + $0x18] sm:$0xff]
  %v22 = vld [vmem:[%s1 + $0x20] sm:$0xff]
  %v23 = vld [vmem:[%s1 + $0x28] sm:$0xff]
  %v24 = vld [vmem:[%s1 + $0x30] sm:$0xff]
  %v25 = vld [vmem:[%s1 + $0x38] sm:$0xff]
  %v26 = vld [vmem:[%s1 + $0x40] sm:$0xff]
  %v27 = vld [vmem:[%s1 + $0x48] sm:$0xff]
  %v28 = vld [vmem:[%s1 + $0x50] sm:$0xff]
  %v29 = vld [vmem:[%s1 + $0x58] sm:$0xff]
  %v30 = vld [vmem:[%s1 + $0x60] sm:$0xff]
  %v31 = vld [vmem:[%s1 + $0x68] sm:$0xff]
  %v32 = vld [vmem:[%s1 + $0x70] sm:$0xff]
  %v33 = vld [vmem:[%s1 + $0x78] sm:$0xff]
  %v34 = vld [vmem:[%s1 + $0x80] sm:$0xff]
  %v35 = vld [vmem:[%s1 + $0x88] sm:$0xff]
  %v36 = vld [vmem:[%s1 + $0x90] sm:$0xff]
  %v37 = vld [vmem:[%s1 + $0x98] sm:$0xff]
  %v38 = vld [vmem:[%s1 + $0xa0] sm:$0xff]
  %v39 = vld [vmem:[%s1 + $0xa8] sm:$0xff]
  %v40 = vld [vmem:[%s1 + $0xb0] sm:$0xff]
  %v41 = vld [vmem:[%s1 + $0xb8] sm:$0xff]
  %v42 = vld [vmem:[%s1 + $0xc0] sm:$0xff]
  %v43 = vld [vmem:[%s1 + $0xc8] sm:$0xff]
  %v44 = vld [vmem:[%s1 + $0xd0] sm:$0xff]
  %v45 = vld [vmem:[%s1 + $0xd8] sm:$0xff]
  %v46 = vld [vmem:[%s1 + $0xe0] sm:$0xff]
  %v47 = vld [vmem:[%s1 + $0xe8] sm:$0xff]
  %v48 = vld [vmem:[%s1 + $0xf0] sm:$0xff]
  %v49 = vld [vmem:[%s1 + $0xf8] sm:$0xff]
  %v50 = vld [vmem:[%s1 + $0x100] sm:$0xff]
  %v51 = vld [vmem:[%s1 + $0x108] sm:$0xff]
  %v52 = vld [vmem:[%s1 + $0x110] sm:$0xff]
  %v53 = vld [vmem:[%s1 + $0x118] sm:$0xff]
  %v54 = vld [vmem:[%s1 + $0x120] sm:$0xff]
  %v55 = vld [vmem:[%s1 + $0x128] sm:$0xff]
  %v56 = vld [vmem:[%s2] sm:$0xff]
  %v57 = vld [vmem:[%s2 + $0x8] sm:$0xff]
  %59 = vset.pattern.permute.xlu0 0
  %60 = vperm.xlu0 %59, %v56
  %v61 = vpop.permute.xlu0 %60
  %64 = vset.pattern.permute.xlu0 0
  %65 = vperm.xlu0 %64, %v57
  %v66 = vpop.permute.xlu0 %65
  %vm68 = vcmask 195584
  %v70 = vsel %vm68, %v15, 0
  %v73 = vsel %vm68, %v17, 0
  %75 = vmatprep.subr.mxu0 %v19
  %76 = vmatpush1.msra.mxu0 %v18
  %77 = vmatprep.subr.mxu0 %v21
  %78 = vmatpush1.msra.mxu0 %v20
  %79 = vmatprep.subr.mxu0 %v23
  %80 = vmatpush1.msra.mxu0 %v22
  %81 = vmatprep.subr.mxu0 %v25
  %82 = vmatpush1.msra.mxu0 %v24
  %83 = vmatprep.subr.mxu0 %v27
  %84 = vmatpush1.msra.mxu0 %v26
  %85 = vmatprep.subr.mxu0 %v29
  %86 = vmatpush1.msra.mxu0 %v28
  %87 = vmatprep.subr.mxu0 %v31
  %88 = vmatpush1.msra.mxu0 %v30
  %89 = vmatprep.subr.mxu0 %v33
  %90 = vmatpush1.msra.mxu0 %v32
  %91 = vmatprep.subr.mxu0 %v35
  %92 = vmatpush1.msra.mxu0 %v34
  %93 = vmatprep.subr.mxu0 %v37
  %94 = vmatpush1.msra.mxu0 %v36
  %95 = vmatprep.subr.mxu0 %v39
  %96 = vmatpush1.msra.mxu0 %v38
  %97 = vmatprep.subr.mxu0 %v41
  %98 = vmatpush1.msra.mxu0 %v40
  %99 = vmatprep.subr.mxu0 %v43
  %100 = vmatpush1.msra.mxu0 %v42
  %101 = vmatprep.subr.mxu0 %v45
  %102 = vmatpush1.msra.mxu0 %v44
  %103 = vmatprep.subr.mxu0 %v47
  %104 = vmatpush1.msra.mxu0 %v46
  %105 = vmatprep.subr.mxu0 %v49
  %106 = vmatpush1.msra.mxu0 %v48
  %107 = vmatprep.subr.mxu0 %v51
  %108 = vmatpush1.msra.mxu0 %v50
  %109 = vmatprep.subr.mxu0 %v53
  %110 = vmatpush1.msra.mxu0 %v52
  %111 = vmatprep.subr.mxu0 %v55
  %112 = vmatpush1.msra.mxu0 %v54
  %113 = vmatprep.subr.mxu0 0.0
  %114 = vmatpush1.msra.mxu0 0.0
  %115 = vmatprep.subr.mxu0 0.0
  %116 = vmatpush1.msra.mxu0 0.0
  %117 = vmatprep.subr.mxu0 0.0
  %118 = vmatpush1.msra.mxu0 0.0
  %119 = vmatprep.subr.mxu0 0.0
  %120 = vmatpush1.msra.mxu0 0.0
  %121 = vmatprep.subr.mxu0 0.0
  %122 = vmatpush1.msra.mxu0 0.0
  %123 = vmatprep.subr.mxu0 0.0
  %124 = vmatpush1.msra.mxu0 0.0
  %125 = vmatprep.subr.mxu0 0.0
  %126 = vmatpush1.msra.mxu0 0.0
  %127 = vmatprep.subr.mxu0 0.0
  %128 = vmatpush1.msra.mxu0 0.0
  %129 = vmatprep.subr.mxu0 0.0
  %130 = vmatpush1.msra.mxu0 0.0
  %131 = vmatprep.subr.mxu0 0.0
  %132 = vmatpush1.msra.mxu0 0.0
  %133 = vmatprep.subr.mxu0 0.0
  %134 = vmatpush1.msra.mxu0 0.0
  %135 = vmatprep.subr.mxu0 0.0
  %136 = vmatpush1.msra.mxu0 0.0
  %137 = vmatprep.subr.mxu0 0.0
  %138 = vmatpush1.msra.mxu0 0.0
  %139 = vmatprep.mubr.f32.mxu0 %v70
  %140 = vmatmul.mubr.f32.gmra.mrb[0].mxu0 %v14
  %v141 = vpop.f32.mrb[0].mxu0
  %v142 = vadd.f32 %v61, %v141
  %v143 = vpop.f32.mrb[0].mxu0
  %v144 = vadd.f32 %v61, %v143
  %145 = vmatprep.mubr.f32.mxu0 %v73
  %146 = vmatmul.mubr.f32.gmra.mrb[0].mxu0 %v16
  %v147 = vpop.f32.mrb[0].mxu0
  %v148 = vadd.f32 %v66, %v147
  %v149 = vpop.f32.mrb[0].mxu0
  %v150 = vadd.f32 %v66, %v149
  %151 = vdwg.mxu0
  %v152 = vmax.f32 %v142, 0.0
  %v153 = vmax.f32 %v144, 0.0
  %v154 = vmax.f32 %v148, 0.0
  %v155 = vmax.f32 %v150, 0.0
  %156 = vst [vmem:[%s3] sm:$0xff] %v152
  %157 = vst [vmem:[%s3 + $0x8] sm:$0xff] %v153
  %158 = vst [vmem:[%s3 + $0x10] sm:$0xff] %v154
  %159 = vst [vmem:[%s3 + $0x18] sm:$0xff] %v155
  // Predicated region
  $region14: #{forward.4} parent=0 // pred_check
    _
  $region15: #{forward.4} parent=0 // pred_check_branch
    %161 = sbr.rel (0) target = $region17
  $region16: #{forward.4} parent=0 // pred_region
    _
  $region17: #{forward.4} parent=0 // pred_fallthru
    _
  // Predicated region
  $region18: #{forward.4} parent=0 // pred_check
    _
  $region19: #{forward.4} parent=0 // pred_check_branch
    %163 = sbr.rel (0) target = $region21
  $region20: #{forward.4} parent=0 // pred_region
    _
  $region21: #{forward.4} parent=0 // pred_fallthru
    _

// kernel: forward.5
$region0: #{forward.5}
  #allocation0 [shape = 'u32[]', space=smem, size = 0x4, offset = 0x4, fixed_abs, tag = 'smem constant byte address 0x4 - core index']
  #allocation1 [shape = 'u32[144,128]{1,0:T(1,128)}', space=vmem, size = 0x12000, scoped, tag = 'internal scratch']
  %s0 = inlined_call_operand.vmem [shape: f32[8,400], index: 0, kind: input, shape index: {}]
  %s1 = inlined_call_operand.vmem [shape: f32[400,128], index: 1, kind: input, shape index: {}]
  %s2 = inlined_call_operand.vmem [shape: f32[1,128], index: 2, kind: input, shape index: {}]
  %s3 = inlined_call_operand.vmem [shape: f32[128,128], index: 3, kind: input, shape index: {}]
  %s4 = inlined_call_operand.vmem [shape: f32[1,128], index: 4, kind: input, shape index: {}]
  %s5 = inlined_call_operand.vmem [shape: f32[128,128], index: 5, kind: input, shape index: {}]
  %s6 = inlined_call_operand.vmem [shape: f32[1,128], index: 6, kind: input, shape index: {}]
  %s7 = inlined_call_operand.vmem [shape: f32[8,128], index: 7, kind: output, shape index: {}]
  %s8 = sld [smem:[#allocation0]]
  $region38: #{forward.5} parent=0
    _
  %s10 = ssub.s32 1, %s8
  %s11 = scalar_select 0, %s10, %s8
  // Predicated region
  $region2: #{forward.5} parent=0 // pred_check
    _
  $region3: #{forward.5} parent=0 // pred_check_branch
    %13 = sbr.rel (0) target = $region5
  $region4: #{forward.5} parent=0 // pred_region
    _
  $region5: #{forward.5} parent=0 // pred_fallthru
    _
  // Predicated region
  $region6: #{forward.5} parent=0 // pred_check
    _
  $region7: #{forward.5} parent=0 // pred_check_branch
    %15 = sbr.rel (0) target = $region9
  $region8: #{forward.5} parent=0 // pred_region
    _
  $region9: #{forward.5} parent=0 // pred_fallthru
    _
  // Predicated region
  $region10: #{forward.5} parent=0 // pred_check
    _
  $region11: #{forward.5} parent=0 // pred_check_branch
    %17 = sbr.rel (0) target = $region13
  $region12: #{forward.5} parent=0 // pred_region
    _
  $region13: #{forward.5} parent=0 // pred_fallthru
    _
  // Predicated region
  $region14: #{forward.5} parent=0 // pred_check
    _
  $region15: #{forward.5} parent=0 // pred_check_branch
    %19 = sbr.rel (0) target = $region17
  $region16: #{forward.5} parent=0 // pred_region
    _
  $region17: #{forward.5} parent=0 // pred_fallthru
    _
  // Predicated region
  $region18: #{forward.5} parent=0 // pred_check
    _
  $region19: #{forward.5} parent=0 // pred_check_branch
    %21 = sbr.rel (0) target = $region21
  $region20: #{forward.5} parent=0 // pred_region
    _
  $region21: #{forward.5} parent=0 // pred_fallthru
    _
  // Predicated region
  $region22: #{forward.5} parent=0 // pred_check
    _
  $region23: #{forward.5} parent=0 // pred_check_branch
    %23 = sbr.rel (0) target = $region25
  $region24: #{forward.5} parent=0 // pred_region
    _
  $region25: #{forward.5} parent=0 // pred_fallthru
    _
  // Predicated region
  $region26: #{forward.5} parent=0 // pred_check
    _
  $region27: #{forward.5} parent=0 // pred_check_branch
    %25 = sbr.rel (0) target = $region29
  $region28: #{forward.5} parent=0 // pred_region
    _
  $region29: #{forward.5} parent=0 // pred_fallthru
    _
  %v26 = vld [vmem:[%s0] sm:$0xff]
  %v27 = vld [vmem:[%s0 + $0x8] sm:$0xff]
  %v28 = vld [vmem:[%s0 + $0x10] sm:$0xff]
  %v29 = vld [vmem:[%s0 + $0x18] sm:$0xff]
  %v30 = vld [vmem:[%s1] sm:$0xff]
  %v31 = vld [vmem:[%s1 + $0x8] sm:$0xff]
  %v32 = vld [vmem:[%s1 + $0x10] sm:$0xff]
  %v33 = vld [vmem:[%s1 + $0x18] sm:$0xff]
  %v34 = vld [vmem:[%s1 + $0x20] sm:$0xff]
  %v35 = vld [vmem:[%s1 + $0x28] sm:$0xff]
  %v36 = vld [vmem:[%s1 + $0x30] sm:$0xff]
  %v37 = vld [vmem:[%s1 + $0x38] sm:$0xff]
  %v38 = vld [vmem:[%s1 + $0x40] sm:$0xff]
  %v39 = vld [vmem:[%s1 + $0x48] sm:$0xff]
  %v40 = vld [vmem:[%s1 + $0x50] sm:$0xff]
  %v41 = vld [vmem:[%s1 + $0x58] sm:$0xff]
  %v42 = vld [vmem:[%s1 + $0x60] sm:$0xff]
  %v43 = vld [vmem:[%s1 + $0x68] sm:$0xff]
  %v44 = vld [vmem:[%s1 + $0x70] sm:$0xff]
  %v45 = vld [vmem:[%s1 + $0x78] sm:$0xff]
  %v46 = vld [vmem:[%s1 + $0x80] sm:$0xff]
  %v47 = vld [vmem:[%s1 + $0x88] sm:$0xff]
  %v48 = vld [vmem:[%s1 + $0x90] sm:$0xff]
  %v49 = vld [vmem:[%s1 + $0x98] sm:$0xff]
  %v50 = vld [vmem:[%s1 + $0xa0] sm:$0xff]
  %v51 = vld [vmem:[%s1 + $0xa8] sm:$0xff]
  %v52 = vld [vmem:[%s1 + $0xb0] sm:$0xff]
  %v53 = vld [vmem:[%s1 + $0xb8] sm:$0xff]
  %v54 = vld [vmem:[%s1 + $0xc0] sm:$0xff]
  %v55 = vld [vmem:[%s1 + $0xc8] sm:$0xff]
  %v56 = vld [vmem:[%s1 + $0xd0] sm:$0xff]
  %v57 = vld [vmem:[%s1 + $0xd8] sm:$0xff]
  %v58 = vld [vmem:[%s1 + $0xe0] sm:$0xff]
  %v59 = vld [vmem:[%s1 + $0xe8] sm:$0xff]
  %v60 = vld [vmem:[%s1 + $0xf0] sm:$0xff]
  %v61 = vld [vmem:[%s1 + $0xf8] sm:$0xff]
  %v62 = vld [vmem:[%s1 + $0x100] sm:$0xff]
  %v63 = vld [vmem:[%s1 + $0x108] sm:$0xff]
  %v64 = vld [vmem:[%s1 + $0x110] sm:$0xff]
  %v65 = vld [vmem:[%s1 + $0x118] sm:$0xff]
  %v66 = vld [vmem:[%s1 + $0x120] sm:$0xff]
  %v67 = vld [vmem:[%s1 + $0x128] sm:$0xff]
  %v68 = vld [vmem:[%s1 + $0x130] sm:$0xff]
  %v69 = vld [vmem:[%s1 + $0x138] sm:$0xff]
  %v70 = vld [vmem:[%s1 + $0x140] sm:$0xff]
  %v71 = vld [vmem:[%s1 + $0x148] sm:$0xff]
  %v72 = vld [vmem:[%s1 + $0x150] sm:$0xff]
  %v73 = vld [vmem:[%s1 + $0x158] sm:$0xff]
  %v74 = vld [vmem:[%s1 + $0x160] sm:$0xff]
  %v75 = vld [vmem:[%s1 + $0x168] sm:$0xff]
  %v76 = vld [vmem:[%s1 + $0x170] sm:$0xff]
  %v77 = vld [vmem:[%s1 + $0x178] sm:$0xff]
  %v78 = vld [vmem:[%s1 + $0x180] sm:$0xff]
  %v79 = vld [vmem:[%s1 + $0x188] sm:$0xff]
  %v80 = vld [vmem:[%s2] sm:$0x1]
  %v82 = vlaneseq
  %v83 = vshrl.u32 %v82, 7
  %v84 = vsub.s32 0, %v83
  %v85 = vrot.slane %v80, %v84
  %vm87 = vcmask 130048
  %v89 = vsel %vm87, %v29, 0
  %91 = vmatprep.subr.mxu0 0.0
  %92 = vmatpush1.msra.mxu0 %v30
  %93 = vmatprep.subr.mxu0 0.0
  %94 = vmatpush1.msra.mxu0 %v31
  %95 = vmatprep.subr.mxu0 0.0
  %96 = vmatpush1.msra.mxu0 %v32
  %97 = vmatprep.subr.mxu0 0.0
  %98 = vmatpush1.msra.mxu0 %v33
  %99 = vmatprep.subr.mxu0 0.0
  %100 = vmatpush1.msra.mxu0 %v34
  %101 = vmatprep.subr.mxu0 0.0
  %102 = vmatpush1.msra.mxu0 %v35
  %103 = vmatprep.subr.mxu0 0.0
  %104 = vmatpush1.msra.mxu0 %v36
  %105 = vmatprep.subr.mxu0 0.0
  %106 = vmatpush1.msra.mxu0 %v37
  %107 = vmatprep.subr.mxu0 0.0
  %108 = vmatpush1.msra.mxu0 %v38
  %109 = vmatprep.subr.mxu0 0.0
  %110 = vmatpush1.msra.mxu0 %v39
  %111 = vmatprep.subr.mxu0 0.0
  %112 = vmatpush1.msra.mxu0 %v40
  %113 = vmatprep.subr.mxu0 0.0
  %114 = vmatpush1.msra.mxu0 %v41
  %115 = vmatprep.subr.mxu0 0.0
  %116 = vmatpush1.msra.mxu0 %v42
  %117 = vmatprep.subr.mxu0 0.0
  %118 = vmatpush1.msra.mxu0 %v43
  %119 = vmatprep.subr.mxu0 0.0
  %120 = vmatpush1.msra.mxu0 %v44
  %121 = vmatprep.subr.mxu0 0.0
  %122 = vmatpush1.msra.mxu0 %v45
  %123 = vmatprep.subr.mxu0 0.0
  %124 = vmatpush1.msra.mxu0 %v46
  %125 = vmatprep.subr.mxu0 0.0
  %126 = vmatpush1.msra.mxu0 %v47
  %127 = vmatprep.subr.mxu0 0.0
  %128 = vmatpush1.msra.mxu0 %v48
  %129 = vmatprep.subr.mxu0 0.0
  %130 = vmatpush1.msra.mxu0 %v49
  %131 = vmatprep.subr.mxu0 0.0
  %132 = vmatpush1.msra.mxu0 %v50
  %133 = vmatprep.subr.mxu0 0.0
  %134 = vmatpush1.msra.mxu0 %v51
  %135 = vmatprep.subr.mxu0 0.0
  %136 = vmatpush1.msra.mxu0 %v52
  %137 = vmatprep.subr.mxu0 0.0
  %138 = vmatpush1.msra.mxu0 %v53
  %139 = vmatprep.subr.mxu0 0.0
  %140 = vmatpush1.msra.mxu0 %v54
  %141 = vmatprep.subr.mxu0 0.0
  %142 = vmatpush1.msra.mxu0 %v55
  %143 = vmatprep.subr.mxu0 0.0
  %144 = vmatpush1.msra.mxu0 %v56
  %145 = vmatprep.subr.mxu0 0.0
  %146 = vmatpush1.msra.mxu0 %v57
  %147 = vmatprep.subr.mxu0 0.0
  %148 = vmatpush1.msra.mxu0 %v58
  %149 = vmatprep.subr.mxu0 0.0
  %150 = vmatpush1.msra.mxu0 %v59
  %151 = vmatprep.subr.mxu0 0.0
  %152 = vmatpush1.msra.mxu0 %v60
  %153 = vmatprep.subr.mxu0 0.0
  %154 = vmatpush1.msra.mxu0 %v61
  %155 = vmatprep.mubr.f32.mxu0 %v27
  %156 = vmatmul.mubr.f32.gmra.mrb[0].mxu0 %v26
  %v157 = vpop.f32.mrb[0].mxu0
  %v158 = vadd.f32 %v85, %v157
  %v159 = vpop.f32.mrb[0].mxu0
  %160 = vdwg.mxu0
  %161 = vmatprep.subr.mxu0 0.0
  %162 = vmatpush1.msra.mxu0 %v62
  %163 = vmatprep.subr.mxu0 0.0
  %164 = vmatpush1.msra.mxu0 %v63
  %165 = vmatprep.subr.mxu0 0.0
  %166 = vmatpush1.msra.mxu0 %v64
  %167 = vmatprep.subr.mxu0 0.0
  %168 = vmatpush1.msra.mxu0 %v65
  %169 = vmatprep.subr.mxu0 0.0
  %170 = vmatpush1.msra.mxu0 %v66
  %171 = vmatprep.subr.mxu0 0.0
  %172 = vmatpush1.msra.mxu0 %v67
  %173 = vmatprep.subr.mxu0 0.0
  %174 = vmatpush1.msra.mxu0 %v68
  %175 = vmatprep.subr.mxu0 0.0
  %176 = vmatpush1.msra.mxu0 %v69
  %177 = vmatprep.subr.mxu0 0.0
  %178 = vmatpush1.msra.mxu0 %v70
  %179 = vmatprep.subr.mxu0 0.0
  %180 = vmatpush1.msra.mxu0 %v71
  %181 = vmatprep.subr.mxu0 0.0
  %182 = vmatpush1.msra.mxu0 %v72
  %183 = vmatprep.subr.mxu0 0.0
  %184 = vmatpush1.msra.mxu0 %v73
  %185 = vmatprep.subr.mxu0 0.0
  %186 = vmatpush1.msra.mxu0 %v74
  %187 = vmatprep.subr.mxu0 0.0
  %188 = vmatpush1.msra.mxu0 %v75
  %189 = vmatprep.subr.mxu0 0.0
  %190 = vmatpush1.msra.mxu0 %v76
  %191 = vmatprep.subr.mxu0 0.0
  %192 = vmatpush1.msra.mxu0 %v77
  %193 = vmatprep.subr.mxu0 0.0
  %194 = vmatpush1.msra.mxu0 %v78
  %195 = vmatprep.subr.mxu0 0.0
  %196 = vmatpush1.msra.mxu0 %v79
  %197 = vmatprep.subr.mxu0 0.0
  %198 = vmatpush1.msra.mxu0 0.0
  %199 = vmatprep.subr.mxu0 0.0
  %200 = vmatpush1.msra.mxu0 0.0
  %201 = vmatprep.subr.mxu0 0.0
  %202 = vmatpush1.msra.mxu0 0.0
  %203 = vmatprep.subr.mxu0 0.0
  %204 = vmatpush1.msra.mxu0 0.0
  %205 = vmatprep.subr.mxu0 0.0
  %206 = vmatpush1.msra.mxu0 0.0
  %207 = vmatprep.subr.mxu0 0.0
  %208 = vmatpush1.msra.mxu0 0.0
  %209 = vmatprep.subr.mxu0 0.0
  %210 = vmatpush1.msra.mxu0 0.0
  %211 = vmatprep.subr.mxu0 0.0
  %212 = vmatpush1.msra.mxu0 0.0
  %213 = vmatprep.subr.mxu0 0.0
  %214 = vmatpush1.msra.mxu0 0.0
  %215 = vmatprep.subr.mxu0 0.0
  %216 = vmatpush1.msra.mxu0 0.0
  %217 = vmatprep.subr.mxu0 0.0
  %218 = vmatpush1.msra.mxu0 0.0
  %219 = vmatprep.subr.mxu0 0.0
  %220 = vmatpush1.msra.mxu0 0.0
  %221 = vmatprep.subr.mxu0 0.0
  %222 = vmatpush1.msra.mxu0 0.0
  %223 = vmatprep.subr.mxu0 0.0
  %224 = vmatpush1.msra.mxu0 0.0
  %225 = vmatprep.mubr.f32.mxu0 %v89
  %226 = vmatmul.mubr.f32.gmra.mrb[0].mxu0 %v28
  %v227 = vpop.f32.mrb[0].mxu0
  %v228 = vadd.f32 %v158, %v227
  %v229 = vpop.f32.mrb[0].mxu0
  %230 = vdwg.mxu0
  %v231 = vmax.f32 %v228, 0.0
  %v232 = vld [vmem:[%s3] sm:$0xff]
  %v233 = vld [vmem:[%s3 + $0x8] sm:$0xff]
  %v234 = vld [vmem:[%s3 + $0x10] sm:$0xff]
  %v235 = vld [vmem:[%s3 + $0x18] sm:$0xff]
  %v236 = vld [vmem:[%s3 + $0x20] sm:$0xff]
  %v237 = vld [vmem:[%s3 + $0x28] sm:$0xff]
  %v238 = vld [vmem:[%s3 + $0x30] sm:$0xff]
  %v239 = vld [vmem:[%s3 + $0x38] sm:$0xff]
  %v240 = vld [vmem:[%s3 + $0x40] sm:$0xff]
  %v241 = vld [vmem:[%s3 + $0x48] sm:$0xff]
  %v242 = vld [vmem:[%s3 + $0x50] sm:$0xff]
  %v243 = vld [vmem:[%s3 + $0x58] sm:$0xff]
  %v244 = vld [vmem:[%s3 + $0x60] sm:$0xff]
  %v245 = vld [vmem:[%s3 + $0x68] sm:$0xff]
  %v246 = vld [vmem:[%s3 + $0x70] sm:$0xff]
  %v247 = vld [vmem:[%s3 + $0x78] sm:$0xff]
  %v248 = vld [vmem:[%s4] sm:$0x1]
  %v250 = vlaneseq
  %v251 = vshrl.u32 %v250, 7
  %v252 = vsub.s32 0, %v251
  %v253 = vrot.slane %v248, %v252
  %255 = vmatprep.subr.mxu0 0.0
  %256 = vmatpush1.msra.mxu0 %v232
  %257 = vmatprep.subr.mxu0 0.0
  %258 = vmatpush1.msra.mxu0 %v233
  %259 = vmatprep.subr.mxu0 0.0
  %260 = vmatpush1.msra.mxu0 %v234
  %261 = vmatprep.subr.mxu0 0.0
  %262 = vmatpush1.msra.mxu0 %v235
  %263 = vmatprep.subr.mxu0 0.0
  %264 = vmatpush1.msra.mxu0 %v236
  %265 = vmatprep.subr.mxu0 0.0
  %266 = vmatpush1.msra.mxu0 %v237
  %267 = vmatprep.subr.mxu0 0.0
  %268 = vmatpush1.msra.mxu0 %v238
  %269 = vmatprep.subr.mxu0 0.0
  %270 = vmatpush1.msra.mxu0 %v239
  %271 = vmatprep.subr.mxu0 0.0
  %272 = vmatpush1.msra.mxu0 %v240
  %273 = vmatprep.subr.mxu0 0.0
  %274 = vmatpush1.msra.mxu0 %v241
  %275 = vmatprep.subr.mxu0 0.0
  %276 = vmatpush1.msra.mxu0 %v242
  %277 = vmatprep.subr.mxu0 0.0
  %278 = vmatpush1.msra.mxu0 %v243
  %279 = vmatprep.subr.mxu0 0.0
  %280 = vmatpush1.msra.mxu0 %v244
  %281 = vmatprep.subr.mxu0 0.0
  %282 = vmatpush1.msra.mxu0 %v245
  %283 = vmatprep.subr.mxu0 0.0
  %284 = vmatpush1.msra.mxu0 %v246
  %285 = vmatprep.subr.mxu0 0.0
  %286 = vmatpush1.msra.mxu0 %v247
  %287 = vmatprep.subr.mxu0 0.0
  %288 = vmatpush1.msra.mxu0 0.0
  %289 = vmatprep.subr.mxu0 0.0
  %290 = vmatpush1.msra.mxu0 0.0
  %291 = vmatprep.subr.mxu0 0.0
  %292 = vmatpush1.msra.mxu0 0.0
  %293 = vmatprep.subr.mxu0 0.0
  %294 = vmatpush1.msra.mxu0 0.0
  %295 = vmatprep.subr.mxu0 0.0
  %296 = vmatpush1.msra.mxu0 0.0
  %297 = vmatprep.subr.mxu0 0.0
  %298 = vmatpush1.msra.mxu0 0.0
  %299 = vmatprep.subr.mxu0 0.0
  %300 = vmatpush1.msra.mxu0 0.0
  %301 = vmatprep.subr.mxu0 0.0
  %302 = vmatpush1.msra.mxu0 0.0
  %303 = vmatprep.subr.mxu0 0.0
  %304 = vmatpush1.msra.mxu0 0.0
  %305 = vmatprep.subr.mxu0 0.0
  %306 = vmatpush1.msra.mxu0 0.0
  %307 = vmatprep.subr.mxu0 0.0
  %308 = vmatpush1.msra.mxu0 0.0
  %309 = vmatprep.subr.mxu0 0.0
  %310 = vmatpush1.msra.mxu0 0.0
  %311 = vmatprep.subr.mxu0 0.0
  %312 = vmatpush1.msra.mxu0 0.0
  %313 = vmatprep.subr.mxu0 0.0
  %314 = vmatpush1.msra.mxu0 0.0
  %315 = vmatprep.subr.mxu0 0.0
  %316 = vmatpush1.msra.mxu0 0.0
  %317 = vmatprep.subr.mxu0 0.0
  %318 = vmatpush1.msra.mxu0 0.0
  %319 = vmatprep.mubr.f32.mxu0 0.0
  %320 = vmatmul.mubr.f32.gmra.mrb[0].mxu0 %v231
  %v321 = vpop.f32.mrb[0].mxu0
  %v322 = vadd.f32 %v253, %v321
  %v323 = vpop.f32.mrb[0].mxu0
  %324 = vdwg.mxu0
  %v325 = vmax.f32 %v322, 0.0
  %v326 = vld [vmem:[%s5] sm:$0xff]
  %v327 = vld [vmem:[%s5 + $0x8] sm:$0xff]
  %v328 = vld [vmem:[%s5 + $0x10] sm:$0xff]
  %v329 = vld [vmem:[%s5 + $0x18] sm:$0xff]
  %v330 = vld [vmem:[%s5 + $0x20] sm:$0xff]
  %v331 = vld [vmem:[%s5 + $0x28] sm:$0xff]
  %v332 = vld [vmem:[%s5 + $0x30] sm:$0xff]
  %v333 = vld [vmem:[%s5 + $0x38] sm:$0xff]
  %v334 = vld [vmem:[%s5 + $0x40] sm:$0xff]
  %v335 = vld [vmem:[%s5 + $0x48] sm:$0xff]
  %v336 = vld [vmem:[%s5 + $0x50] sm:$0xff]
  %v337 = vld [vmem:[%s5 + $0x58] sm:$0xff]
  %v338 = vld [vmem:[%s5 + $0x60] sm:$0xff]
  %v339 = vld [vmem:[%s5 + $0x68] sm:$0xff]
  %v340 = vld [vmem:[%s5 + $0x70] sm:$0xff]
  %v341 = vld [vmem:[%s5 + $0x78] sm:$0xff]
  %v342 = vld [vmem:[%s6] sm:$0x1]
  %v344 = vlaneseq
  %v345 = vshrl.u32 %v344, 7
  %v346 = vsub.s32 0, %v345
  %v347 = vrot.slane %v342, %v346
  %349 = vmatprep.subr.mxu0 0.0
  %350 = vmatpush1.msra.mxu0 %v326
  %351 = vmatprep.subr.mxu0 0.0
  %352 = vmatpush1.msra.mxu0 %v327
  %353 = vmatprep.subr.mxu0 0.0
  %354 = vmatpush1.msra.mxu0 %v328
  %355 = vmatprep.subr.mxu0 0.0
  %356 = vmatpush1.msra.mxu0 %v329
  %357 = vmatprep.subr.mxu0 0.0
  %358 = vmatpush1.msra.mxu0 %v330
  %359 = vmatprep.subr.mxu0 0.0
  %360 = vmatpush1.msra.mxu0 %v331
  %361 = vmatprep.subr.mxu0 0.0
  %362 = vmatpush1.msra.mxu0 %v332
  %363 = vmatprep.subr.mxu0 0.0
  %364 = vmatpush1.msra.mxu0 %v333
  %365 = vmatprep.subr.mxu0 0.0
  %366 = vmatpush1.msra.mxu0 %v334
  %367 = vmatprep.subr.mxu0 0.0
  %368 = vmatpush1.msra.mxu0 %v335
  %369 = vmatprep.subr.mxu0 0.0
  %370 = vmatpush1.msra.mxu0 %v336
  %371 = vmatprep.subr.mxu0 0.0
  %372 = vmatpush1.msra.mxu0 %v337
  %373 = vmatprep.subr.mxu0 0.0
  %374 = vmatpush1.msra.mxu0 %v338
  %375 = vmatprep.subr.mxu0 0.0
  %376 = vmatpush1.msra.mxu0 %v339
  %377 = vmatprep.subr.mxu0 0.0
  %378 = vmatpush1.msra.mxu0 %v340
  %379 = vmatprep.subr.mxu0 0.0
  %380 = vmatpush1.msra.mxu0 %v341
  %381 = vmatprep.subr.mxu0 0.0
  %382 = vmatpush1.msra.mxu0 0.0
  %383 = vmatprep.subr.mxu0 0.0
  %384 = vmatpush1.msra.mxu0 0.0
  %385 = vmatprep.subr.mxu0 0.0
  %386 = vmatpush1.msra.mxu0 0.0
  %387 = vmatprep.subr.mxu0 0.0
  %388 = vmatpush1.msra.mxu0 0.0
  %389 = vmatprep.subr.mxu0 0.0
  %390 = vmatpush1.msra.mxu0 0.0
  %391 = vmatprep.subr.mxu0 0.0
  %392 = vmatpush1.msra.mxu0 0.0
  %393 = vmatprep.subr.mxu0 0.0
  %394 = vmatpush1.msra.mxu0 0.0
  %395 = vmatprep.subr.mxu0 0.0
  %396 = vmatpush1.msra.mxu0 0.0
  %397 = vmatprep.subr.mxu0 0.0
  %398 = vmatpush1.msra.mxu0 0.0
  %399 = vmatprep.subr.mxu0 0.0
  %400 = vmatpush1.msra.mxu0 0.0
  %401 = vmatprep.subr.mxu0 0.0
  %402 = vmatpush1.msra.mxu0 0.0
  %403 = vmatprep.subr.mxu0 0.0
  %404 = vmatpush1.msra.mxu0 0.0
  %405 = vmatprep.subr.mxu0 0.0
  %406 = vmatpush1.msra.mxu0 0.0
  %407 = vmatprep.subr.mxu0 0.0
  %408 = vmatpush1.msra.mxu0 0.0
  %409 = vmatprep.subr.mxu0 0.0
  %410 = vmatpush1.msra.mxu0 0.0
  %411 = vmatprep.subr.mxu0 0.0
  %412 = vmatpush1.msra.mxu0 0.0
  %413 = vmatprep.mubr.f32.mxu0 0.0
  %414 = vmatmul.mubr.f32.gmra.mrb[0].mxu0 %v325
  %v415 = vpop.f32.mrb[0].mxu0
  %v416 = vadd.f32 %v347, %v415
  %v417 = vpop.f32.mrb[0].mxu0
  %418 = vdwg.mxu0
  %419 = vst [vmem:[%s7] sm:$0xff] %v416
  // Predicated region
  $region30: #{forward.5} parent=0 // pred_check
    _
  $region31: #{forward.5} parent=0 // pred_check_branch
    %421 = sbr.rel (0) target = $region33
  $region32: #{forward.5} parent=0 // pred_region
    _
  $region33: #{forward.5} parent=0 // pred_fallthru
    _
  // Predicated region
  $region34: #{forward.5} parent=0 // pred_check
    _
  $region35: #{forward.5} parent=0 // pred_check_branch
    %423 = sbr.rel (0) target = $region37
  $region36: #{forward.5} parent=0 // pred_region
    _
  $region37: #{forward.5} parent=0 // pred_fallthru
    _

</llo_original>
